<compile_context>
chip_gen: v7x
topology: tpu7x:2x2x1
jax: 0.10.0
libtpu: 0.0.40
codegen_flags: <defaults>
</compile_context>

<pallas_src>
import jax
import jax.numpy as jnp
from jax.experimental import pallas as pl
from jax.experimental.pallas import tpu as pltpu


_LANE = 128
_SUBLANE = 8
# Conservative budget so the chosen batch tile also fits v7x (64 MiB physical VMEM).
_VMEM_BUDGET_BYTES = 40 * 1024 * 1024


def _mlp_kernel(x_ref,
                w1_ref, b1_ref,
                w2_ref, b2_ref,
                w3_ref, b3_ref,
                w4_ref, b4_ref,
                o_ref):
    # Layer 1: Linear(input_dim -> hidden) + ReLU      (Dropout(0.3) = identity in eval)
    h = jnp.dot(x_ref[...], w1_ref[...],
                preferred_element_type=jnp.float32) + b1_ref[...]
    h = jnp.maximum(h, 0.0)
    # Layer 2: Linear(hidden -> hidden//2) + ReLU      (Dropout(0.2) = identity in eval)
    h = jnp.dot(h.astype(jnp.bfloat16), w2_ref[...],
                preferred_element_type=jnp.float32) + b2_ref[...]
    h = jnp.maximum(h, 0.0)
    # Layer 3: Linear(hidden//2 -> hidden//4) + ReLU   (Dropout(0.1) = identity in eval)
    h = jnp.dot(h.astype(jnp.bfloat16), w3_ref[...],
                preferred_element_type=jnp.float32) + b3_ref[...]
    h = jnp.maximum(h, 0.0)
    # Layer 4: Linear(hidden//4 -> output_dim), output columns zero-padded to 128
    # so the store below is lane-dense (no masked vst / strided writeback).
    out = jnp.dot(h.astype(jnp.bfloat16), w4_ref[...],
                  preferred_element_type=jnp.float32) + b4_ref[...]
    o_ref[...] = out.astype(o_ref.dtype)


def _round_up(v, m):
    return ((v + m - 1) // m) * m


def _default_block_batch(batch):
    """~1024 rows per tile, multiple of 8, and >=2 grid steps when batch allows it."""
    if batch <= _SUBLANE:
        return _SUBLANE
    target = min(1024, batch)
    if batch >= 2 * _SUBLANE:
        # guarantee at least 2 grid steps: enables pipelining + v7x megacore split
        target = min(target, pl.cdiv(batch, 2))
    return _round_up(target, _SUBLANE)


def _vmem_footprint_bytes(bm, dims, out_pad, x_buffers=2):
    """Rough VMEM estimate for one batch tile (streamed tiles + resident params)."""
    in_dim = dims[0]
    w_bytes = sum(dims[i] * dims[i + 1] * 2 for i in range(3)) + dims[3] * out_pad * 2
    b_bytes = sum(d * 4 for d in dims[1:4]) + out_pad * 4
    x_bytes = x_buffers * bm * in_dim * 2            # bf16 input tile, pipelined
    o_bytes = 2 * bm * out_pad * 4                   # f32 output tile, double-buffered
    act_bytes = 2 * bm * (dims[1] + dims[2] + dims[3] + out_pad) * 4   # f32 temporaries
    return w_bytes + b_bytes + x_bytes + o_bytes + act_bytes


def mlp_predictor_forward(x, params, *, block_batch=None):
    """Fused 4-layer MLP inference. x: (B, input_dim). Returns (B, output_dim)."""
    (w1, b1), (w2, b2), (w3, b3), (w4, b4) = params
    batch, in_dim = x.shape
    out_dim = w4.shape[1]
    dims = (in_dim, w1.shape[1], w2.shape[1], w3.shape[1])
    out_pad = _round_up(out_dim, _LANE)

    # ---- operand prep: bf16 weights & x stream, f32 biases, lane-dense last layer
    def prep_b(b, width):
        b = b.reshape(1, -1).astype(jnp.float32)
        if b.shape[1] != width:
            b = jnp.pad(b, ((0, 0), (0, width - b.shape[1])))
        return b

    w1b, w2b, w3b = (w.astype(jnp.bfloat16) for w in (w1, w2, w3))
    w4b = w4.astype(jnp.bfloat16)
    if out_pad != out_dim:
        w4b = jnp.pad(w4b, ((0, 0), (0, out_pad - out_dim)))
    b1f = prep_b(b1, dims[1])
    b2f = prep_b(b2, dims[2])
    b3f = prep_b(b3, dims[3])
    b4f = prep_b(b4, out_pad)

    # ---- batch tile selection / validation
    if block_batch is None:
        bm = _default_block_batch(batch)
    else:
        bm = int(block_batch)
        if bm % _SUBLANE != 0:
            raise ValueError(f"block_batch must be a multiple of {_SUBLANE}, got {bm}")
    while bm > _SUBLANE and _vmem_footprint_bytes(bm, dims, out_pad) > _VMEM_BUDGET_BYTES:
        bm = max(_SUBLANE, _round_up(bm // 2, _SUBLANE))

    batch_pad = _round_up(batch, bm)
    x_bf = x.astype(jnp.bfloat16)
    if batch_pad != batch:
        x_bf = jnp.pad(x_bf, ((0, batch_pad - batch), (0, 0)))

    grid = (batch_pad // bm,)

    def const_spec(shape):
        # Grid-invariant operand: keep one resident copy (no double buffering).
        return pl.BlockSpec(shape, lambda i: (0, 0), pipeline_mode=pl.Buffered(1))

    flops = 2 * batch_pad * (dims[0] * dims[1] + dims[1] * dims[2]
                             + dims[2] * dims[3] + dims[3] * out_pad)
    bytes_accessed = (x_bf.size * 2
                      + sum(a.size * 2 for a in (w1b, w2b, w3b, w4b))
                      + sum(a.size * 4 for a in (b1f, b2f, b3f, b4f))
                      + batch_pad * out_pad * 4)

    out = pl.pallas_call(
        _mlp_kernel,
        out_shape=jax.ShapeDtypeStruct((batch_pad, out_pad), jnp.float32),
        grid_spec=pltpu.PrefetchScalarGridSpec(
            num_scalar_prefetch=0,
            grid=grid,
            in_specs=[
                pl.BlockSpec((bm, in_dim), lambda i: (i, 0)),   # streamed x tile
                const_spec(w1b.shape), const_spec(b1f.shape),
                const_spec(w2b.shape), const_spec(b2f.shape),
                const_spec(w3b.shape), const_spec(b3f.shape),
                const_spec(w4b.shape), const_spec(b4f.shape),
            ],
            out_specs=pl.BlockSpec((bm, out_pad), lambda i: (i, 0)),
        ),
        compiler_params=pltpu.CompilerParams(
            dimension_semantics=("parallel",),
            vmem_limit_bytes=64 * 1024 * 1024,
        ),
        cost_estimate=pl.CostEstimate(
            flops=flops, transcendentals=0, bytes_accessed=bytes_accessed),
    )(x_bf, w1b, b1f, w2b, b2f, w3b, b3f, w4b, b4f)

    return out[:batch, :out_dim].astype(x.dtype)


def init_params(key, input_dim, hidden_dim=256, output_dim=1, dtype=jnp.float32):
    """Deterministic init mirroring nn.Linear shapes (weights stored as (in, out))."""
    dims = [input_dim, hidden_dim, hidden_dim // 2, hidden_dim // 4, output_dim]
    params = []
    for li in range(4):
        fan_in, fan_out = dims[li], dims[li + 1]
        key, kw, kb = jax.random.split(key, 3)
        bound = 1.0 / jnp.sqrt(fan_in)
        w = jax.random.uniform(kw, (fan_in, fan_out), dtype, -bound, bound)
        b = jax.random.uniform(kb, (fan_out,), dtype, -bound, bound)
        params.append((w, b))
    return params


def mlp_reference(x, params, *, mixed_precision=False):
    """Pure-JAX reference. mixed_precision=True mirrors the kernel's bf16 matmul inputs."""
    def mm(a, w):
        if mixed_precision:
            return jnp.dot(a.astype(jnp.bfloat16), w.astype(jnp.bfloat16),
                           preferred_element_type=jnp.float32)
        return jnp.dot(a, w)

    (w1, b1), (w2, b2), (w3, b3), (w4, b4) = params
    h = jnp.maximum(mm(x, w1) + b1, 0.0)
    h = jnp.maximum(mm(h, w2) + b2, 0.0)
    h = jnp.maximum(mm(h, w3) + b3, 0.0)
    return mm(h, w4) + b4


if __name__ == "__main__":
    key = jax.random.PRNGKey(0)
    kx, kp = jax.random.split(key)

    batch = 32
    input_dim = 32
    hidden_dim = 32   # layer widths: 32 -> 32 -> 16 -> 8 -> 1
    output_dim = 1

    x = jax.random.normal(kx, (batch, input_dim), dtype=jnp.float32)
    params = init_params(kp, input_dim, hidden_dim, output_dim)

    out = mlp_predictor_forward(x, params)
    out = jax.block_until_ready(out)
    assert out.shape == (batch, output_dim), out.shape

    # Tight check vs a reference that mirrors the kernel's bf16/f32 mixed precision.
    ref_mixed = mlp_reference(x, params, mixed_precision=True)
    assert jnp.allclose(out, ref_mixed, atol=2e-3, rtol=2e-3), "mismatch vs bf16 reference"

    # Loose sanity check vs the full-f32 reference (bf16 matmul rounding only).
    ref_f32 = mlp_reference(x, params, mixed_precision=False)
    assert jnp.allclose(out, ref_f32, atol=1e-1, rtol=1e-1), "mismatch vs f32 reference"

    print("KERNEL_OK")
</pallas_src>

<mosaic_0001>
module attributes {stable_mosaic.version = 11 : i64} {
  func.func @_mlp_kernel(%arg0: i32, %arg1: memref<16x32xbf16, #tpu.memory_space<vmem>>, %arg2: memref<32x32xbf16, #tpu.memory_space<vmem>>, %arg3: memref<1x32xf32, #tpu.memory_space<vmem>>, %arg4: memref<32x16xbf16, #tpu.memory_space<vmem>>, %arg5: memref<1x16xf32, #tpu.memory_space<vmem>>, %arg6: memref<16x8xbf16, #tpu.memory_space<vmem>>, %arg7: memref<1x8xf32, #tpu.memory_space<vmem>>, %arg8: memref<8x128xbf16, #tpu.memory_space<vmem>>, %arg9: memref<1x128xf32, #tpu.memory_space<vmem>>, %arg10: memref<16x128xf32, #tpu.memory_space<vmem>>) attributes {dimension_semantics = [#tpu.dimension_semantics<parallel>], iteration_bounds = array<i64: 2>, scalar_prefetch = 0 : i64, scratch_operands = 0 : i64, tpu.core_type = #tpu.core_type<tc>, window_params = [{transform_indices = @transform_0, window_bounds = array<i64: 16, 32>}, {pipeline_mode = #tpu.pipeline_mode<synchronous>, transform_indices = @transform_1, window_bounds = array<i64: 32, 32>}, {pipeline_mode = #tpu.pipeline_mode<synchronous>, transform_indices = @transform_2, window_bounds = array<i64: 1, 32>}, {pipeline_mode = #tpu.pipeline_mode<synchronous>, transform_indices = @transform_3, window_bounds = array<i64: 32, 16>}, {pipeline_mode = #tpu.pipeline_mode<synchronous>, transform_indices = @transform_4, window_bounds = array<i64: 1, 16>}, {pipeline_mode = #tpu.pipeline_mode<synchronous>, transform_indices = @transform_5, window_bounds = array<i64: 16, 8>}, {pipeline_mode = #tpu.pipeline_mode<synchronous>, transform_indices = @transform_6, window_bounds = array<i64: 1, 8>}, {pipeline_mode = #tpu.pipeline_mode<synchronous>, transform_indices = @transform_7, window_bounds = array<i64: 8, 128>}, {pipeline_mode = #tpu.pipeline_mode<synchronous>, transform_indices = @transform_8, window_bounds = array<i64: 1, 128>}, {transform_indices = @transform_9, window_bounds = array<i64: 16, 128>}]} {
    %c0 = arith.constant 0 : index
    %c0_0 = arith.constant 0 : index
    %0 = vector.load %arg1[%c0, %c0_0] : memref<16x32xbf16, #tpu.memory_space<vmem>>, vector<16x32xbf16>
    %c0_1 = arith.constant 0 : index
    %c0_2 = arith.constant 0 : index
    %1 = vector.load %arg2[%c0_1, %c0_2] : memref<32x32xbf16, #tpu.memory_space<vmem>>, vector<32x32xbf16>
    %cst = arith.constant dense<0.000000e+00> : vector<16x32xf32>
    %2 = tpu.matmul %0, %1, %cst {dimension_numbers = #tpu.dot_dimension_numbers<[1], [0], [0], [1], [0, 0, 1, 1], [], []>} : vector<16x32xbf16>, vector<32x32xbf16>, vector<16x32xf32> -> vector<16x32xf32>
    %c0_3 = arith.constant 0 : index
    %c0_4 = arith.constant 0 : index
    %3 = vector.load %arg3[%c0_3, %c0_4] : memref<1x32xf32, #tpu.memory_space<vmem>>, vector<1x32xf32>
    %4 = vector.broadcast %3 : vector<1x32xf32> to vector<16x32xf32>
    %5 = arith.addf %2, %4 : vector<16x32xf32>
    %cst_5 = arith.constant 0.000000e+00 : f32
    %6 = vector.broadcast %cst_5 : f32 to vector<16x32xf32>
    %7 = arith.maximumf %5, %6 : vector<16x32xf32>
    %8 = arith.truncf %7 : vector<16x32xf32> to vector<16x32xbf16>
    %c0_6 = arith.constant 0 : index
    %c0_7 = arith.constant 0 : index
    %9 = vector.load %arg4[%c0_6, %c0_7] : memref<32x16xbf16, #tpu.memory_space<vmem>>, vector<32x16xbf16>
    %cst_8 = arith.constant dense<0.000000e+00> : vector<16x16xf32>
    %10 = tpu.matmul %8, %9, %cst_8 {dimension_numbers = #tpu.dot_dimension_numbers<[1], [0], [0], [1], [0, 0, 1, 1], [], []>} : vector<16x32xbf16>, vector<32x16xbf16>, vector<16x16xf32> -> vector<16x16xf32>
    %c0_9 = arith.constant 0 : index
    %c0_10 = arith.constant 0 : index
    %11 = vector.load %arg5[%c0_9, %c0_10] : memref<1x16xf32, #tpu.memory_space<vmem>>, vector<1x16xf32>
    %12 = vector.broadcast %11 : vector<1x16xf32> to vector<16x16xf32>
    %13 = arith.addf %10, %12 : vector<16x16xf32>
    %cst_11 = arith.constant 0.000000e+00 : f32
    %14 = vector.broadcast %cst_11 : f32 to vector<16x16xf32>
    %15 = arith.maximumf %13, %14 : vector<16x16xf32>
    %16 = arith.truncf %15 : vector<16x16xf32> to vector<16x16xbf16>
    %c0_12 = arith.constant 0 : index
    %c0_13 = arith.constant 0 : index
    %17 = vector.load %arg6[%c0_12, %c0_13] : memref<16x8xbf16, #tpu.memory_space<vmem>>, vector<16x8xbf16>
    %cst_14 = arith.constant dense<0.000000e+00> : vector<16x8xf32>
    %18 = tpu.matmul %16, %17, %cst_14 {dimension_numbers = #tpu.dot_dimension_numbers<[1], [0], [0], [1], [0, 0, 1, 1], [], []>} : vector<16x16xbf16>, vector<16x8xbf16>, vector<16x8xf32> -> vector<16x8xf32>
    %c0_15 = arith.constant 0 : index
    %c0_16 = arith.constant 0 : index
    %19 = vector.load %arg7[%c0_15, %c0_16] : memref<1x8xf32, #tpu.memory_space<vmem>>, vector<1x8xf32>
    %20 = vector.broadcast %19 : vector<1x8xf32> to vector<16x8xf32>
    %21 = arith.addf %18, %20 : vector<16x8xf32>
    %cst_17 = arith.constant 0.000000e+00 : f32
    %22 = vector.broadcast %cst_17 : f32 to vector<16x8xf32>
    %23 = arith.maximumf %21, %22 : vector<16x8xf32>
    %24 = arith.truncf %23 : vector<16x8xf32> to vector<16x8xbf16>
    %c0_18 = arith.constant 0 : index
    %c0_19 = arith.constant 0 : index
    %25 = vector.load %arg8[%c0_18, %c0_19] : memref<8x128xbf16, #tpu.memory_space<vmem>>, vector<8x128xbf16>
    %cst_20 = arith.constant dense<0.000000e+00> : vector<16x128xf32>
    %26 = tpu.matmul %24, %25, %cst_20 {dimension_numbers = #tpu.dot_dimension_numbers<[1], [0], [0], [1], [0, 0, 1, 1], [], []>} : vector<16x8xbf16>, vector<8x128xbf16>, vector<16x128xf32> -> vector<16x128xf32>
    %c0_21 = arith.constant 0 : index
    %c0_22 = arith.constant 0 : index
    %27 = vector.load %arg9[%c0_21, %c0_22] : memref<1x128xf32, #tpu.memory_space<vmem>>, vector<1x128xf32>
    %28 = vector.broadcast %27 : vector<1x128xf32> to vector<16x128xf32>
    %29 = arith.addf %26, %28 : vector<16x128xf32>
    %c0_23 = arith.constant 0 : index
    %c0_24 = arith.constant 0 : index
    %30 = vector.load %arg10[%c0_23, %c0_24] : memref<16x128xf32, #tpu.memory_space<vmem>>, vector<16x128xf32>
    tpu.vector_store %arg10[%c0_23, %c0_24], %29 {strides = array<i32>} : memref<16x128xf32, #tpu.memory_space<vmem>>, vector<16x128xf32>,
    return
  }
  func.func @transform_0(%arg0: i32) -> (i32, i32) {
    %c0_i32 = arith.constant 0 : i32
    %c0_i32_0 = arith.constant 0 : i32
    return %arg0, %c0_i32 : i32, i32
  }
  func.func @transform_1(%arg0: i32) -> (i32, i32) {
    %c0_i32 = arith.constant 0 : i32
    %c0_i32_0 = arith.constant 0 : i32
    %c0_i32_1 = arith.constant 0 : i32
    return %c0_i32, %c0_i32_0 : i32, i32
  }
  func.func @transform_2(%arg0: i32) -> (i32, i32) {
    %c0_i32 = arith.constant 0 : i32
    %c0_i32_0 = arith.constant 0 : i32
    %c0_i32_1 = arith.constant 0 : i32
    return %c0_i32, %c0_i32_0 : i32, i32
  }
  func.func @transform_3(%arg0: i32) -> (i32, i32) {
    %c0_i32 = arith.constant 0 : i32
    %c0_i32_0 = arith.constant 0 : i32
    %c0_i32_1 = arith.constant 0 : i32
    return %c0_i32, %c0_i32_0 : i32, i32
  }
  func.func @transform_4(%arg0: i32) -> (i32, i32) {
    %c0_i32 = arith.constant 0 : i32
    %c0_i32_0 = arith.constant 0 : i32
    %c0_i32_1 = arith.constant 0 : i32
    return %c0_i32, %c0_i32_0 : i32, i32
  }
  func.func @transform_5(%arg0: i32) -> (i32, i32) {
    %c0_i32 = arith.constant 0 : i32
    %c0_i32_0 = arith.constant 0 : i32
    %c0_i32_1 = arith.constant 0 : i32
    return %c0_i32, %c0_i32_0 : i32, i32
  }
  func.func @transform_6(%arg0: i32) -> (i32, i32) {
    %c0_i32 = arith.constant 0 : i32
    %c0_i32_0 = arith.constant 0 : i32
    %c0_i32_1 = arith.constant 0 : i32
    return %c0_i32, %c0_i32_0 : i32, i32
  }
  func.func @transform_7(%arg0: i32) -> (i32, i32) {
    %c0_i32 = arith.constant 0 : i32
    %c0_i32_0 = arith.constant 0 : i32
    %c0_i32_1 = arith.constant 0 : i32
    return %c0_i32, %c0_i32_0 : i32, i32
  }
  func.func @transform_8(%arg0: i32) -> (i32, i32) {
    %c0_i32 = arith.constant 0 : i32
    %c0_i32_0 = arith.constant 0 : i32
    %c0_i32_1 = arith.constant 0 : i32
    return %c0_i32, %c0_i32_0 : i32, i32
  }
  func.func @transform_9(%arg0: i32) -> (i32, i32) {
    %c0_i32 = arith.constant 0 : i32
    %c0_i32_0 = arith.constant 0 : i32
    return %arg0, %c0_i32 : i32, i32
  }
}

</mosaic_0001>

<llo_original>
// kernel: tpu_custom_call.1
$region0: #{tpu_custom_call.1}
  #allocation0 [shape = 'u32[]', space=smem, size = 0x4, offset = 0x4, fixed_abs, tag = 'smem constant byte address 0x4 - core index']
  #allocation1 [shape = 'u32[144,128]{1,0:T(1,128)}', space=vmem, size = 0x12000, scoped, tag = 'internal scratch']
  %s0 = inlined_call_operand.hbm [shape: bf16[32,32], index: 0, kind: input, shape index: {}]
  %s1 = inlined_call_operand.hbm [shape: bf16[32,32], index: 1, kind: input, shape index: {}]
  %s2 = inlined_call_operand.hbm [shape: f32[1,32], index: 2, kind: input, shape index: {}]
  %s3 = inlined_call_operand.hbm [shape: bf16[32,16], index: 3, kind: input, shape index: {}]
  %s4 = inlined_call_operand.hbm [shape: f32[1,16], index: 4, kind: input, shape index: {}]
  %s5 = inlined_call_operand.hbm [shape: bf16[16,8], index: 5, kind: input, shape index: {}]
  %s6 = inlined_call_operand.hbm [shape: f32[1,8], index: 6, kind: input, shape index: {}]
  %s7 = inlined_call_operand.hbm [shape: bf16[8,128], index: 7, kind: input, shape index: {}]
  %s8 = inlined_call_operand.hbm [shape: f32[1,128], index: 8, kind: input, shape index: {}]
  %s9 = inlined_call_operand.hbm [shape: f32[32,128], index: 9, kind: output, shape index: {}]
  %s10 = sld [smem:[#allocation0]]
  $region105: #{tpu_custom_call.1} parent=0
    _
  %s12 = ssub.s32 1, %s10
  %s13 = scalar_select 0, %s12, %s10
  $region1: #{tpu_custom_call.1} parent=0
    #allocation2 [shape = 'u8[8192]{0}', space=vmem, size = 0x2000, scoped, tag = 'input window, operand 0']
    #allocation3 [shape = 's32[2]{0}', space=sflag, size = 0x8, scoped, tag = 'scoped memory for tpu_custom_call.1']
    #allocation4 [shape = 's32[2]{0}', space=sflag, size = 0x8, scoped, tag = 'scoped memory for tpu_custom_call.1']
    #allocation5 [shape = 'u8[8192]{0}', space=vmem, size = 0x2000, scoped, tag = 'input window, operand 1, single buffered']
    #allocation6 [shape = 's32[1]{0}', space=sflag, size = 0x4, scoped, tag = 'scoped memory for tpu_custom_call.1']
    #allocation7 [shape = 'u8[512]{0}', space=vmem, size = 0x400, scoped, tag = 'input window, operand 2, single buffered']
    #allocation8 [shape = 'u8[8192]{0}', space=vmem, size = 0x2000, scoped, tag = 'input window, operand 3, single buffered']
    #allocation9 [shape = 's32[1]{0}', space=sflag, size = 0x4, scoped, tag = 'scoped memory for tpu_custom_call.1']
    #allocation10 [shape = 'u8[512]{0}', space=vmem, size = 0x400, scoped, tag = 'input window, operand 4, single buffered']
    #allocation11 [shape = 'u8[4096]{0}', space=vmem, size = 0x1000, scoped, tag = 'input window, operand 5, single buffered']
    #allocation12 [shape = 's32[1]{0}', space=sflag, size = 0x4, scoped, tag = 'scoped memory for tpu_custom_call.1']
    #allocation13 [shape = 'u8[512]{0}', space=vmem, size = 0x400, scoped, tag = 'input window, operand 6, single buffered']
    #allocation14 [shape = 'u8[2048]{0}', space=vmem, size = 0x800, scoped, tag = 'input window, operand 7, single buffered']
    #allocation15 [shape = 's32[1]{0}', space=sflag, size = 0x4, scoped, tag = 'scoped memory for tpu_custom_call.1']
    #allocation16 [shape = 'u8[512]{0}', space=vmem, size = 0x400, scoped, tag = 'input window, operand 8, single buffered']
    #allocation17 [shape = 'u8[16384]{0}', space=vmem, size = 0x4000, scoped, tag = 'output window, operand 0']
    %14 = vsyncpa [#allocation3], 0
    %s15 = scalar_lea.sflag [#allocation3], 1
    %16 = vsyncpa %s15, 0
    %17 = vsyncpa [#allocation6], 0
    %18 = vsyncpa [#allocation9], 0
    %19 = vsyncpa [#allocation12], 0
    %20 = vsyncpa [#allocation15], 0
    %21 = vsyncpa [#allocation4], 0
    %s22 = scalar_lea.sflag [#allocation4], 1
    %23 = vsyncpa %s22, 0
    loop: start=0, step=1, limit=4
    $region2: #{tpu_custom_call.1} parent=1 // loop_pre_header
      _
    $region3: #{tpu_custom_call.1} parent=1 // loop_header
      %s25 = sphi 0, %s29
      %p26 = scmp.ge.s32.totalorder %s25, 4
      %s35 = sphi 0, %s37
      %s38 = sphi 0, %s35
      %s39 = sphi 0, %s38
      %s55 = sphi 0, %s39
      %s59 = sphi 0, %s59
      %s61 = sphi 0, %s59
      %s62 = sphi 0, %s61
      %s76 = sphi 0, %s62
      %s80 = sphi 0, %s80
      %s82 = sphi 0, %s80
      %s83 = sphi 0, %s82
      %s97 = sphi 0, %s83
      %s101 = sphi 0, %s101
      %s103 = sphi 0, %s101
      %s104 = sphi 0, %s103
      %s118 = sphi 0, %s104
      %s122 = sphi 0, %s122
      %s124 = sphi 0, %s122
      %s125 = sphi 0, %s124
      %s139 = sphi 0, %s125
      %s143 = sphi 0, %s143
      %s145 = sphi 0, %s143
      %s146 = sphi 0, %s145
      %s160 = sphi 0, %s146
      %s164 = sphi 0, %s164
      %s166 = sphi 0, %s164
      %s167 = sphi 0, %s166
      %s181 = sphi 0, %s167
      %s185 = sphi 0, %s185
      %s187 = sphi 0, %s185
      %s188 = sphi 0, %s187
      %s202 = sphi 0, %s188
      %s206 = sphi 0, %s206
      %s208 = sphi 0, %s206
      %s209 = sphi 0, %s208
      %s223 = sphi 0, %s209
      %s229 = sphi 0, %s231
      %s232 = sphi 0, %s229
      %s233 = sphi 0, %s232
      %s249 = sphi 0, %s233
    $region4: #{tpu_custom_call.1} parent=1 // loop_header_branch
      %28 = sbr.rel (%p26) target = $region8
    $region5: #{tpu_custom_call.1} parent=1 // loop_body
      %s30 = ssub.s32 %s25, 1
      %s31 = ssub.s32 %s25, 2
      %s32 = sadd.s32 %s25, 1
      %s33 = ssub.s32 %s25, %s32
      %p34 = scmp.eq.s32.totalorder %s33, 0
      %s36 = sadd.s32 %s35, 1
      %s37 = scalar_select %p34, %s35, %s36
      %p40 = pneg %p34
      %p41 = scmp.eq.s32.totalorder %s25, 1
      %p42 = por %p40, %p41
      %p43 = scmp.ne.s32.totalorder %s35, %s38
      %p44 = scmp.eq.s32.totalorder %s25, 0
      %p45 = por %p43, %p44
      %p46 = scmp.ne.s32.totalorder %s35, %s38
      %p47 = scmp.eq.s32.totalorder %s30, 1
      %p48 = por %p46, %p47
      %p49 = scmp.ne.s32.totalorder %s38, %s39
      %p50 = scmp.eq.s32.totalorder %s30, 0
      %p51 = por %p49, %p50
      %p52 = scmp.ne.s32.totalorder %s38, %s39
      %p53 = scmp.eq.s32.totalorder %s31, 1
      %p54 = por %p52, %p53
      %p56 = scmp.ne.s32.totalorder %s39, %s55
      %p57 = scmp.eq.s32.totalorder %s31, 0
      %p58 = por %p56, %p57
      %s60 = sadd.s32 %s59, 1
      %p63 = scmp.eq.s32.totalorder %s25, 1
      %p64 = scmp.ne.s32.totalorder %s59, %s61
      %p65 = scmp.eq.s32.totalorder %s25, 0
      %p66 = por %p64, %p65
      %p67 = scmp.ne.s32.totalorder %s59, %s61
      %p68 = scmp.eq.s32.totalorder %s30, 1
      %p69 = por %p67, %p68
      %p70 = scmp.ne.s32.totalorder %s61, %s62
      %p71 = scmp.eq.s32.totalorder %s30, 0
      %p72 = por %p70, %p71
      %p73 = scmp.ne.s32.totalorder %s61, %s62
      %p74 = scmp.eq.s32.totalorder %s31, 1
      %p75 = por %p73, %p74
      %p77 = scmp.ne.s32.totalorder %s62, %s76
      %p78 = scmp.eq.s32.totalorder %s31, 0
      %p79 = por %p77, %p78
      %s81 = sadd.s32 %s80, 1
      %p84 = scmp.eq.s32.totalorder %s25, 1
      %p85 = scmp.ne.s32.totalorder %s80, %s82
      %p86 = scmp.eq.s32.totalorder %s25, 0
      %p87 = por %p85, %p86
      %p88 = scmp.ne.s32.totalorder %s80, %s82
      %p89 = scmp.eq.s32.totalorder %s30, 1
      %p90 = por %p88, %p89
      %p91 = scmp.ne.s32.totalorder %s82, %s83
      %p92 = scmp.eq.s32.totalorder %s30, 0
      %p93 = por %p91, %p92
      %p94 = scmp.ne.s32.totalorder %s82, %s83
      %p95 = scmp.eq.s32.totalorder %s31, 1
      %p96 = por %p94, %p95
      %p98 = scmp.ne.s32.totalorder %s83, %s97
      %p99 = scmp.eq.s32.totalorder %s31, 0
      %p100 = por %p98, %p99
      %s102 = sadd.s32 %s101, 1
      %p105 = scmp.eq.s32.totalorder %s25, 1
      %p106 = scmp.ne.s32.totalorder %s101, %s103
      %p107 = scmp.eq.s32.totalorder %s25, 0
      %p108 = por %p106, %p107
      %p109 = scmp.ne.s32.totalorder %s101, %s103
      %p110 = scmp.eq.s32.totalorder %s30, 1
      %p111 = por %p109, %p110
      %p112 = scmp.ne.s32.totalorder %s103, %s104
      %p113 = scmp.eq.s32.totalorder %s30, 0
      %p114 = por %p112, %p113
      %p115 = scmp.ne.s32.totalorder %s103, %s104
      %p116 = scmp.eq.s32.totalorder %s31, 1
      %p117 = por %p115, %p116
      %p119 = scmp.ne.s32.totalorder %s104, %s118
      %p120 = scmp.eq.s32.totalorder %s31, 0
      %p121 = por %p119, %p120
      %s123 = sadd.s32 %s122, 1
      %p126 = scmp.eq.s32.totalorder %s25, 1
      %p127 = scmp.ne.s32.totalorder %s122, %s124
      %p128 = scmp.eq.s32.totalorder %s25, 0
      %p129 = por %p127, %p128
      %p130 = scmp.ne.s32.totalorder %s122, %s124
      %p131 = scmp.eq.s32.totalorder %s30, 1
      %p132 = por %p130, %p131
      %p133 = scmp.ne.s32.totalorder %s124, %s125
      %p134 = scmp.eq.s32.totalorder %s30, 0
      %p135 = por %p133, %p134
      %p136 = scmp.ne.s32.totalorder %s124, %s125
      %p137 = scmp.eq.s32.totalorder %s31, 1
      %p138 = por %p136, %p137
      %p140 = scmp.ne.s32.totalorder %s125, %s139
      %p141 = scmp.eq.s32.totalorder %s31, 0
      %p142 = por %p140, %p141
      %s144 = sadd.s32 %s143, 1
      %p147 = scmp.eq.s32.totalorder %s25, 1
      %p148 = scmp.ne.s32.totalorder %s143, %s145
      %p149 = scmp.eq.s32.totalorder %s25, 0
      %p150 = por %p148, %p149
      %p151 = scmp.ne.s32.totalorder %s143, %s145
      %p152 = scmp.eq.s32.totalorder %s30, 1
      %p153 = por %p151, %p152
      %p154 = scmp.ne.s32.totalorder %s145, %s146
      %p155 = scmp.eq.s32.totalorder %s30, 0
      %p156 = por %p154, %p155
      %p157 = scmp.ne.s32.totalorder %s145, %s146
      %p158 = scmp.eq.s32.totalorder %s31, 1
      %p159 = por %p157, %p158
      %p161 = scmp.ne.s32.totalorder %s146, %s160
      %p162 = scmp.eq.s32.totalorder %s31, 0
      %p163 = por %p161, %p162
      %s165 = sadd.s32 %s164, 1
      %p168 = scmp.eq.s32.totalorder %s25, 1
      %p169 = scmp.ne.s32.totalorder %s164, %s166
      %p170 = scmp.eq.s32.totalorder %s25, 0
      %p171 = por %p169, %p170
      %p172 = scmp.ne.s32.totalorder %s164, %s166
      %p173 = scmp.eq.s32.totalorder %s30, 1
      %p174 = por %p172, %p173
      %p175 = scmp.ne.s32.totalorder %s166, %s167
      %p176 = scmp.eq.s32.totalorder %s30, 0
      %p177 = por %p175, %p176
      %p178 = scmp.ne.s32.totalorder %s166, %s167
      %p179 = scmp.eq.s32.totalorder %s31, 1
      %p180 = por %p178, %p179
      %p182 = scmp.ne.s32.totalorder %s167, %s181
      %p183 = scmp.eq.s32.totalorder %s31, 0
      %p184 = por %p182, %p183
      %s186 = sadd.s32 %s185, 1
      %p189 = scmp.eq.s32.totalorder %s25, 1
      %p190 = scmp.ne.s32.totalorder %s185, %s187
      %p191 = scmp.eq.s32.totalorder %s25, 0
      %p192 = por %p190, %p191
      %p193 = scmp.ne.s32.totalorder %s185, %s187
      %p194 = scmp.eq.s32.totalorder %s30, 1
      %p195 = por %p193, %p194
      %p196 = scmp.ne.s32.totalorder %s187, %s188
      %p197 = scmp.eq.s32.totalorder %s30, 0
      %p198 = por %p196, %p197
      %p199 = scmp.ne.s32.totalorder %s187, %s188
      %p200 = scmp.eq.s32.totalorder %s31, 1
      %p201 = por %p199, %p200
      %p203 = scmp.ne.s32.totalorder %s188, %s202
      %p204 = scmp.eq.s32.totalorder %s31, 0
      %p205 = por %p203, %p204
      %s207 = sadd.s32 %s206, 1
      %p210 = scmp.eq.s32.totalorder %s25, 1
      %p211 = scmp.ne.s32.totalorder %s206, %s208
      %p212 = scmp.eq.s32.totalorder %s25, 0
      %p213 = por %p211, %p212
      %p214 = scmp.ne.s32.totalorder %s206, %s208
      %p215 = scmp.eq.s32.totalorder %s30, 1
      %p216 = por %p214, %p215
      %p217 = scmp.ne.s32.totalorder %s208, %s209
      %p218 = scmp.eq.s32.totalorder %s30, 0
      %p219 = por %p217, %p218
      %p220 = scmp.ne.s32.totalorder %s208, %s209
      %p221 = scmp.eq.s32.totalorder %s31, 1
      %p222 = por %p220, %p221
      %p224 = scmp.ne.s32.totalorder %s209, %s223
      %p225 = scmp.eq.s32.totalorder %s31, 0
      %p226 = por %p224, %p225
      %s227 = ssub.s32 %s25, %s32
      %p228 = scmp.eq.s32.totalorder %s227, 0
      %s230 = sadd.s32 %s229, 1
      %s231 = scalar_select %p228, %s229, %s230
      %p234 = pneg %p228
      %p235 = scmp.eq.s32.totalorder %s25, 1
      %p236 = por %p234, %p235
      %p237 = scmp.ne.s32.totalorder %s229, %s232
      %p238 = scmp.eq.s32.totalorder %s25, 0
      %p239 = por %p237, %p238
      %p240 = scmp.ne.s32.totalorder %s229, %s232
      %p241 = scmp.eq.s32.totalorder %s30, 1
      %p242 = por %p240, %p241
      %p243 = scmp.ne.s32.totalorder %s232, %s233
      %p244 = scmp.eq.s32.totalorder %s30, 0
      %p245 = por %p243, %p244
      %p246 = scmp.ne.s32.totalorder %s232, %s233
      %p247 = scmp.eq.s32.totalorder %s31, 1
      %p248 = por %p246, %p247
      %p250 = scmp.ne.s32.totalorder %s233, %s249
      %p251 = scmp.eq.s32.totalorder %s31, 0
      %p252 = por %p250, %p251
      %p253 = scmp.le.s32.totalorder 1, %s25
      %p254 = scmp.lt.s32.totalorder %s25, 3
      %p255 = pnand %p253, %p254
      %p256 = pneg %p255
      // Predicated region
      $region9: #{tpu_custom_call.1} parent=5 // pred_check
        _
      $region10: #{tpu_custom_call.1} parent=5 // pred_check_branch
        %258 = sbr.rel (%p255) target = $region12
      $region11: #{tpu_custom_call.1} parent=5 // pred_region
        %s259 = ssub.s32 %s25, 1
        // Predicated region
        $region13: #{tpu_custom_call.1} parent=11 // pred_check
          %p260 = pneg %p72
        $region14: #{tpu_custom_call.1} parent=11 // pred_check_branch
          %262 = sbr.rel (%p260) target = $region16
        $region15: #{tpu_custom_call.1} parent=11 // pred_region
          %s264 = ssub.s32 256, 256
          %265 = vsyncadd [#allocation6], %s264
          %s266 = sshll.u32 [#allocation5], 4
          %s267 = int_to_ptr.vmem [resolvable:$true] %s266
          %272 = dma.hbm_to_vmem [thread:$0]  %s1, 256, %s267, [#allocation6], 64, 64, 4
        $region16: #{tpu_custom_call.1} parent=11 // pred_fallthru
          _
        // Predicated region
        $region17: #{tpu_custom_call.1} parent=11 // pred_check
          %p273 = pneg %p93
        $region18: #{tpu_custom_call.1} parent=11 // pred_check_branch
          %275 = sbr.rel (%p273) target = $region20
        $region19: #{tpu_custom_call.1} parent=11 // pred_region
          %s277 = ssub.s32 16, 16
          %278 = vsyncadd [#allocation6], %s277
          %s280 = sshll.u32 [#allocation7], 4
          %s281 = int_to_ptr.vmem [resolvable:$true] %s280
          %283 = dma.hbm_to_vmem [thread:$0]  %s2, 16, %s281, [#allocation6]
        $region20: #{tpu_custom_call.1} parent=11 // pred_fallthru
          _
        // Predicated region
        $region21: #{tpu_custom_call.1} parent=11 // pred_check
          %p284 = pneg %p114
        $region22: #{tpu_custom_call.1} parent=11 // pred_check_branch
          %286 = sbr.rel (%p284) target = $region24
        $region23: #{tpu_custom_call.1} parent=11 // pred_region
          %s288 = ssub.s32 256, 256
          %289 = vsyncadd [#allocation9], %s288
          %s290 = sshll.u32 [#allocation8], 4
          %s291 = int_to_ptr.vmem [resolvable:$true] %s290
          %296 = dma.hbm_to_vmem [thread:$0]  %s3, 256, %s291, [#allocation9], 64, 64, 4
        $region24: #{tpu_custom_call.1} parent=11 // pred_fallthru
          _
        // Predicated region
        $region25: #{tpu_custom_call.1} parent=11 // pred_check
          %p297 = pneg %p135
        $region26: #{tpu_custom_call.1} parent=11 // pred_check_branch
          %299 = sbr.rel (%p297) target = $region28
        $region27: #{tpu_custom_call.1} parent=11 // pred_region
          %s301 = ssub.s32 16, 16
          %302 = vsyncadd [#allocation9], %s301
          %s304 = sshll.u32 [#allocation10], 4
          %s305 = int_to_ptr.vmem [resolvable:$true] %s304
          %307 = dma.hbm_to_vmem [thread:$0]  %s4, 16, %s305, [#allocation9]
        $region28: #{tpu_custom_call.1} parent=11 // pred_fallthru
          _
        // Predicated region
        $region29: #{tpu_custom_call.1} parent=11 // pred_check
          %p308 = pneg %p156
        $region30: #{tpu_custom_call.1} parent=11 // pred_check_branch
          %310 = sbr.rel (%p308) target = $region32
        $region31: #{tpu_custom_call.1} parent=11 // pred_region
          %s312 = ssub.s32 128, 128
          %313 = vsyncadd [#allocation12], %s312
          %s314 = sshll.u32 [#allocation11], 4
          %s315 = int_to_ptr.vmem [resolvable:$true] %s314
          %320 = dma.hbm_to_vmem [thread:$0]  %s5, 128, %s315, [#allocation12], 64, 64, 4
        $region32: #{tpu_custom_call.1} parent=11 // pred_fallthru
          _
        // Predicated region
        $region33: #{tpu_custom_call.1} parent=11 // pred_check
          %p321 = pneg %p177
        $region34: #{tpu_custom_call.1} parent=11 // pred_check_branch
          %323 = sbr.rel (%p321) target = $region36
        $region35: #{tpu_custom_call.1} parent=11 // pred_region
          %s325 = ssub.s32 16, 16
          %326 = vsyncadd [#allocation12], %s325
          %s328 = sshll.u32 [#allocation13], 4
          %s329 = int_to_ptr.vmem [resolvable:$true] %s328
          %331 = dma.hbm_to_vmem [thread:$0]  %s6, 16, %s329, [#allocation12]
        $region36: #{tpu_custom_call.1} parent=11 // pred_fallthru
          _
        // Predicated region
        $region37: #{tpu_custom_call.1} parent=11 // pred_check
          %p332 = pneg %p198
        $region38: #{tpu_custom_call.1} parent=11 // pred_check_branch
          %334 = sbr.rel (%p332) target = $region40
        $region39: #{tpu_custom_call.1} parent=11 // pred_region
          %s336 = ssub.s32 64, 64
          %337 = vsyncadd [#allocation15], %s336
          %s339 = sshll.u32 [#allocation14], 4
          %s340 = int_to_ptr.vmem [resolvable:$true] %s339
          %342 = dma.hbm_to_vmem [thread:$0]  %s7, 64, %s340, [#allocation15]
        $region40: #{tpu_custom_call.1} parent=11 // pred_fallthru
          _
        // Predicated region
        $region41: #{tpu_custom_call.1} parent=11 // pred_check
          %p343 = pneg %p219
        $region42: #{tpu_custom_call.1} parent=11 // pred_check_branch
          %345 = sbr.rel (%p343) target = $region44
        $region43: #{tpu_custom_call.1} parent=11 // pred_region
          %s347 = ssub.s32 16, 16
          %348 = vsyncadd [#allocation15], %s347
          %s350 = sshll.u32 [#allocation16], 4
          %s351 = int_to_ptr.vmem [resolvable:$true] %s350
          %353 = dma.hbm_to_vmem [thread:$0]  %s8, 16, %s351, [#allocation15]
        $region44: #{tpu_custom_call.1} parent=11 // pred_fallthru
          _
      $region12: #{tpu_custom_call.1} parent=5 // pred_fallthru
        _
      %p354 = scmp.lt.s32.totalorder %s25, 2
      // Predicated region
      $region45: #{tpu_custom_call.1} parent=5 // pred_check
        %p355 = pneg %p354
      $region46: #{tpu_custom_call.1} parent=5 // pred_check_branch
        %357 = sbr.rel (%p355) target = $region48
      $region47: #{tpu_custom_call.1} parent=5 // pred_region
        // Predicated region
        $region49: #{tpu_custom_call.1} parent=47 // pred_check
          %p358 = pneg %p45
        $region50: #{tpu_custom_call.1} parent=47 // pred_check_branch
          %360 = sbr.rel (%p358) target = $region52
        $region51: #{tpu_custom_call.1} parent=47 // pred_region
          %s361 = sand.u32 %s35, 1
          %s362 = scalar_lea.sflag [#allocation3], %s361
          %s363 = sand.u32 %s35, 1
          %s364 = smul.addr %s363, 8
          %s365 = scalar_lea.vmem [#allocation2], %s364
          %s366 = smul.u32 2, %s25
          %s368 = ssub.s32 128, 128
          %369 = vsyncadd %s362, %s368
          %s370 = smul.addr %s366, 64
          %s371 = scalar_lea.hbm %s0, %s370
          %s372 = sshll.u32 %s365, 4
          %s373 = int_to_ptr.vmem [resolvable:$true] %s372
          %378 = dma.hbm_to_vmem [thread:$0]  %s371, 128, %s373, %s362, 64, 64, 4
        $region52: #{tpu_custom_call.1} parent=47 // pred_fallthru
          _
      $region48: #{tpu_custom_call.1} parent=5 // pred_fallthru
        _
      %p379 = scmp.le.s32.totalorder 1, %s25
      %p380 = scmp.lt.s32.totalorder %s25, 3
      %p381 = pnand %p379, %p380
      %p382 = pneg %p381
      // Predicated region
      $region53: #{tpu_custom_call.1} parent=5 // pred_check
        _
      $region54: #{tpu_custom_call.1} parent=5 // pred_check_branch
        %384 = sbr.rel (%p381) target = $region56
      $region55: #{tpu_custom_call.1} parent=5 // pred_region
        %s385 = ssub.s32 %s25, 1
        %s386 = sand.u32 %s38, 1
        %s387 = scalar_lea.sflag [#allocation3], %s386
        %s388 = sand.u32 %s38, 1
        %s389 = smul.addr %s388, 8
        %s390 = scalar_lea.vmem [#allocation2], %s389
        // Predicated region
        $region57: #{tpu_custom_call.1} parent=55 // pred_check
          %p391 = pneg %p51
        $region58: #{tpu_custom_call.1} parent=55 // pred_check_branch
          %393 = sbr.rel (%p391) target = $region60
        $region59: #{tpu_custom_call.1} parent=55 // pred_region
          %394 = dma.done %s387, 128
        $region60: #{tpu_custom_call.1} parent=55 // pred_fallthru
          _
        // Predicated region
        $region61: #{tpu_custom_call.1} parent=55 // pred_check
          %p395 = pneg %p72
        $region62: #{tpu_custom_call.1} parent=55 // pred_check_branch
          %397 = sbr.rel (%p395) target = $region64
        $region63: #{tpu_custom_call.1} parent=55 // pred_region
          %398 = dma.done [#allocation6], 256
        $region64: #{tpu_custom_call.1} parent=55 // pred_fallthru
          _
        // Predicated region
        $region65: #{tpu_custom_call.1} parent=55 // pred_check
          %p399 = pneg %p93
        $region66: #{tpu_custom_call.1} parent=55 // pred_check_branch
          %401 = sbr.rel (%p399) target = $region68
        $region67: #{tpu_custom_call.1} parent=55 // pred_region
          %402 = dma.done [#allocation6], 16
        $region68: #{tpu_custom_call.1} parent=55 // pred_fallthru
          _
        // Predicated region
        $region69: #{tpu_custom_call.1} parent=55 // pred_check
          %p403 = pneg %p114
        $region70: #{tpu_custom_call.1} parent=55 // pred_check_branch
          %405 = sbr.rel (%p403) target = $region72
        $region71: #{tpu_custom_call.1} parent=55 // pred_region
          %406 = dma.done [#allocation9], 256
        $region72: #{tpu_custom_call.1} parent=55 // pred_fallthru
          _
        // Predicated region
        $region73: #{tpu_custom_call.1} parent=55 // pred_check
          %p407 = pneg %p135
        $region74: #{tpu_custom_call.1} parent=55 // pred_check_branch
          %409 = sbr.rel (%p407) target = $region76
        $region75: #{tpu_custom_call.1} parent=55 // pred_region
          %410 = dma.done [#allocation9], 16
        $region76: #{tpu_custom_call.1} parent=55 // pred_fallthru
          _
        // Predicated region
        $region77: #{tpu_custom_call.1} parent=55 // pred_check
          %p411 = pneg %p156
        $region78: #{tpu_custom_call.1} parent=55 // pred_check_branch
          %413 = sbr.rel (%p411) target = $region80
        $region79: #{tpu_custom_call.1} parent=55 // pred_region
          %414 = dma.done [#allocation12], 128
        $region80: #{tpu_custom_call.1} parent=55 // pred_fallthru
          _
        // Predicated region
        $region81: #{tpu_custom_call.1} parent=55 // pred_check
          %p415 = pneg %p177
        $region82: #{tpu_custom_call.1} parent=55 // pred_check_branch
          %417 = sbr.rel (%p415) target = $region84
        $region83: #{tpu_custom_call.1} parent=55 // pred_region
          %418 = dma.done [#allocation12], 16
        $region84: #{tpu_custom_call.1} parent=55 // pred_fallthru
          _
        // Predicated region
        $region85: #{tpu_custom_call.1} parent=55 // pred_check
          %p419 = pneg %p198
        $region86: #{tpu_custom_call.1} parent=55 // pred_check_branch
          %421 = sbr.rel (%p419) target = $region88
        $region87: #{tpu_custom_call.1} parent=55 // pred_region
          %422 = dma.done [#allocation15], 64
        $region88: #{tpu_custom_call.1} parent=55 // pred_fallthru
          _
        // Predicated region
        $region89: #{tpu_custom_call.1} parent=55 // pred_check
          %p423 = pneg %p219
        $region90: #{tpu_custom_call.1} parent=55 // pred_check_branch
          %425 = sbr.rel (%p423) target = $region92
        $region91: #{tpu_custom_call.1} parent=55 // pred_region
          %426 = dma.done [#allocation15], 16
        $region92: #{tpu_custom_call.1} parent=55 // pred_fallthru
          _
        %s427 = sand.u32 %s38, 1
        %s428 = scalar_lea.sflag [#allocation3], %s427
        %s429 = sand.u32 %s38, 1
        %s430 = smul.addr %s429, 8
        %s431 = scalar_lea.vmem [#allocation2], %s430
        %p432 = pneg %p51
        %p433 = pneg %p48
        %p434 = pneg %p72
        %p435 = pneg %p69
        %p436 = pneg %p93
        %p437 = pneg %p90
        %p438 = pneg %p114
        %p439 = pneg %p111
        %p440 = pneg %p135
        %p441 = pneg %p132
        %p442 = pneg %p156
        %p443 = pneg %p153
        %p444 = pneg %p177
        %p445 = pneg %p174
        %p446 = pneg %p198
        %p447 = pneg %p195
        %p448 = pneg %p219
        %p449 = pneg %p216
        %p450 = pneg %p245
        %p451 = pneg %p242
        %s452 = sand.u32 %s232, 1
        %s453 = scalar_lea.sflag [#allocation4], %s452
        %s454 = sand.u32 %s232, 1
        %s455 = smul.addr %s454, 16
        %s456 = scalar_lea.vmem [#allocation17], %s455
        %s457 = smul.u32 2, %s30
        %s458 = smul.u32 2, %s30
        %v460 = vld [vmem:[%s390] sm:$0xf]
        %v461 = vld [vmem:[%s390 + $0x4] sm:$0xf]
        %v462 = vld [vmem:[#allocation5] sm:$0xf]
        %v463 = vld [vmem:[#allocation5 + $0x4] sm:$0xf]
        %v464 = vld [vmem:[#allocation5 + $0x8] sm:$0xf]
        %v465 = vld [vmem:[#allocation5 + $0xc] sm:$0xf]
        %v466 = vld [vmem:[#allocation7] sm:$0x1]
        %v468 = vlaneseq
        %v469 = vshrl.u32 %v468, 7
        %v470 = vsub.s32 0, %v469
        %v471 = vrot.slane %v466, %v470
        %v475 = vunpack.c.l.b16 %v460
        %v476 = vunpack.c.l.b16 %v461
        %v477 = vpack.c.b16 %v476, %v475
        %v482 = vunpack.c.l.b16 %v462
        %v483 = vunpack.c.l.b16 %v463
        %v484 = vunpack.c.l.b16 %v464
        %v485 = vunpack.c.l.b16 %v465
        %v486 = vpack.c.b16 %v483, %v482
        %v487 = vpack.c.b16 %v485, %v484
        %vm490 = vcmask 261120
        %v492 = vsel %vm490, %v477, 0
        %494 = vmatprep.subr.bf16.mxu0 0
        %495 = vmatpush1.bf16.msra.mxu0 %v486
        %496 = vmatprep.subr.bf16.mxu0 0
        %497 = vmatpush1.bf16.msra.mxu0 %v487
        %498 = vmatprep.subr.bf16.mxu0 0
        %499 = vmatpush1.bf16.msra.mxu0 0
        %500 = vmatprep.subr.bf16.mxu0 0
        %501 = vmatpush1.bf16.msra.mxu0 0
        %502 = vmatprep.subr.bf16.mxu0 0
        %503 = vmatpush1.bf16.msra.mxu0 0
        %504 = vmatprep.subr.bf16.mxu0 0
        %505 = vmatpush1.bf16.msra.mxu0 0
        %506 = vmatprep.subr.bf16.mxu0 0
        %507 = vmatpush1.bf16.msra.mxu0 0
        %508 = vmatprep.subr.bf16.mxu0 0
        %509 = vmatpush1.bf16.msra.mxu0 0
        %510 = vmatprep.subr.bf16.mxu0 0
        %511 = vmatpush1.bf16.msra.mxu0 0
        %512 = vmatprep.subr.bf16.mxu0 0
        %513 = vmatpush1.bf16.msra.mxu0 0
        %514 = vmatprep.subr.bf16.mxu0 0
        %515 = vmatpush1.bf16.msra.mxu0 0
        %516 = vmatprep.subr.bf16.mxu0 0
        %517 = vmatpush1.bf16.msra.mxu0 0
        %518 = vmatprep.subr.bf16.mxu0 0
        %519 = vmatpush1.bf16.msra.mxu0 0
        %520 = vmatprep.subr.bf16.mxu0 0
        %521 = vmatpush1.bf16.msra.mxu0 0
        %522 = vmatprep.subr.bf16.mxu0 0
        %523 = vmatpush1.bf16.msra.mxu0 0
        %524 = vmatprep.subr.bf16.mxu0 0
        %525 = vmatpush1.bf16.msra.mxu0 0
        %526 = vmatprep.mubr.bf16.mxu0 0
        %527 = vmatmul.mubr.bf16.gmra.mrb[0].mxu0 %v492
        %v528 = vpop.f32.mrb[0].mxu0
        %v529 = vadd.f32 %v471, %v528
        %v530 = vpop.f32.mrb[0].mxu0
        %v531 = vpop.f32.mrb[0].mxu0
        %v532 = vadd.f32 %v471, %v531
        %v533 = vpop.f32.mrb[0].mxu0
        %534 = vdwg.mxu0
        %v535 = vmax.f32 %v529, 0.0
        %v536 = vmax.f32 %v532, 0.0
        %v537 = vpack.c.bf16 %v536, %v535
        %v538 = vld [vmem:[#allocation8] sm:$0xf]
        %v539 = vld [vmem:[#allocation8 + $0x4] sm:$0xf]
        %v540 = vld [vmem:[#allocation8 + $0x8] sm:$0xf]
        %v541 = vld [vmem:[#allocation8 + $0xc] sm:$0xf]
        %v542 = vld [vmem:[#allocation10] sm:$0x1]
        %v544 = vlaneseq
        %v545 = vshrl.u32 %v544, 7
        %v546 = vsub.s32 0, %v545
        %v547 = vrot.slane %v542, %v546
        %v553 = vunpack.c.l.b16 %v538
        %v554 = vunpack.c.l.b16 %v539
        %v555 = vunpack.c.l.b16 %v540
        %v556 = vunpack.c.l.b16 %v541
        %v557 = vpack.c.b16 %v554, %v553
        %v558 = vpack.c.b16 %v556, %v555
        %v562 = vsel %vm490, %v537, 0
        %564 = vmatprep.subr.bf16.mxu0 0
        %565 = vmatpush1.bf16.msra.mxu0 %v557
        %566 = vmatprep.subr.bf16.mxu0 0
        %567 = vmatpush1.bf16.msra.mxu0 %v558
        %568 = vmatprep.subr.bf16.mxu0 0
        %569 = vmatpush1.bf16.msra.mxu0 0
        %570 = vmatprep.subr.bf16.mxu0 0
        %571 = vmatpush1.bf16.msra.mxu0 0
        %572 = vmatprep.subr.bf16.mxu0 0
        %573 = vmatpush1.bf16.msra.mxu0 0
        %574 = vmatprep.subr.bf16.mxu0 0
        %575 = vmatpush1.bf16.msra.mxu0 0
        %576 = vmatprep.subr.bf16.mxu0 0
        %577 = vmatpush1.bf16.msra.mxu0 0
        %578 = vmatprep.subr.bf16.mxu0 0
        %579 = vmatpush1.bf16.msra.mxu0 0
        %580 = vmatprep.subr.bf16.mxu0 0
        %581 = vmatpush1.bf16.msra.mxu0 0
        %582 = vmatprep.subr.bf16.mxu0 0
        %583 = vmatpush1.bf16.msra.mxu0 0
        %584 = vmatprep.subr.bf16.mxu0 0
        %585 = vmatpush1.bf16.msra.mxu0 0
        %586 = vmatprep.subr.bf16.mxu0 0
        %587 = vmatpush1.bf16.msra.mxu0 0
        %588 = vmatprep.subr.bf16.mxu0 0
        %589 = vmatpush1.bf16.msra.mxu0 0
        %590 = vmatprep.subr.bf16.mxu0 0
        %591 = vmatpush1.bf16.msra.mxu0 0
        %592 = vmatprep.subr.bf16.mxu0 0
        %593 = vmatpush1.bf16.msra.mxu0 0
        %594 = vmatprep.subr.bf16.mxu0 0
        %595 = vmatpush1.bf16.msra.mxu0 0
        %596 = vmatprep.mubr.bf16.mxu0 0
        %597 = vmatmul.mubr.bf16.gmra.mrb[0].mxu0 %v562
        %v598 = vpop.f32.mrb[0].mxu0
        %v599 = vadd.f32 %v547, %v598
        %v600 = vpop.f32.mrb[0].mxu0
        %v601 = vpop.f32.mrb[0].mxu0
        %v602 = vadd.f32 %v547, %v601
        %v603 = vpop.f32.mrb[0].mxu0
        %604 = vdwg.mxu0
        %v605 = vmax.f32 %v599, 0.0
        %v606 = vmax.f32 %v602, 0.0
        %v607 = vpack.c.bf16 %v606, %v605
        %v608 = vld [vmem:[#allocation11] sm:$0xf]
        %v609 = vld [vmem:[#allocation11 + $0x4] sm:$0xf]
        %v610 = vld [vmem:[#allocation13] sm:$0x1]
        %v612 = vlaneseq
        %v613 = vshrl.u32 %v612, 7
        %v614 = vsub.s32 0, %v613
        %v615 = vrot.slane %v610, %v614
        %v619 = vunpack.c.l.b16 %v608
        %v620 = vunpack.c.l.b16 %v609
        %v621 = vpack.c.b16 %v620, %v619
        %vm623 = vcmask 130048
        %v625 = vsel %vm623, %v607, 0
        %627 = vmatprep.subr.bf16.mxu0 0
        %628 = vmatpush1.bf16.msra.mxu0 %v621
        %629 = vmatprep.subr.bf16.mxu0 0
        %630 = vmatpush1.bf16.msra.mxu0 0
        %631 = vmatprep.subr.bf16.mxu0 0
        %632 = vmatpush1.bf16.msra.mxu0 0
        %633 = vmatprep.subr.bf16.mxu0 0
        %634 = vmatpush1.bf16.msra.mxu0 0
        %635 = vmatprep.subr.bf16.mxu0 0
        %636 = vmatpush1.bf16.msra.mxu0 0
        %637 = vmatprep.subr.bf16.mxu0 0
        %638 = vmatpush1.bf16.msra.mxu0 0
        %639 = vmatprep.subr.bf16.mxu0 0
        %640 = vmatpush1.bf16.msra.mxu0 0
        %641 = vmatprep.subr.bf16.mxu0 0
        %642 = vmatpush1.bf16.msra.mxu0 0
        %643 = vmatprep.subr.bf16.mxu0 0
        %644 = vmatpush1.bf16.msra.mxu0 0
        %645 = vmatprep.subr.bf16.mxu0 0
        %646 = vmatpush1.bf16.msra.mxu0 0
        %647 = vmatprep.subr.bf16.mxu0 0
        %648 = vmatpush1.bf16.msra.mxu0 0
        %649 = vmatprep.subr.bf16.mxu0 0
        %650 = vmatpush1.bf16.msra.mxu0 0
        %651 = vmatprep.subr.bf16.mxu0 0
        %652 = vmatpush1.bf16.msra.mxu0 0
        %653 = vmatprep.subr.bf16.mxu0 0
        %654 = vmatpush1.bf16.msra.mxu0 0
        %655 = vmatprep.subr.bf16.mxu0 0
        %656 = vmatpush1.bf16.msra.mxu0 0
        %657 = vmatprep.subr.bf16.mxu0 0
        %658 = vmatpush1.bf16.msra.mxu0 0
        %659 = vmatprep.mubr.bf16.mxu0 0
        %660 = vmatmul.mubr.bf16.gmra.mrb[0].mxu0 %v625
        %v661 = vpop.f32.mrb[0].mxu0
        %v662 = vadd.f32 %v615, %v661
        %v663 = vpop.f32.mrb[0].mxu0
        %v664 = vpop.f32.mrb[0].mxu0
        %v665 = vadd.f32 %v615, %v664
        %v666 = vpop.f32.mrb[0].mxu0
        %667 = vdwg.mxu0
        %v668 = vmax.f32 %v662, 0.0
        %v669 = vmax.f32 %v665, 0.0
        %v670 = vpack.c.bf16 %v669, %v668
        %v671 = vld [vmem:[#allocation14] sm:$0xf]
        %v672 = vld [vmem:[#allocation16] sm:$0x1]
        %v674 = vlaneseq
        %v675 = vshrl.u32 %v674, 7
        %v676 = vsub.s32 0, %v675
        %v677 = vrot.slane %v672, %v676
        %vm679 = vcmask 64512
        %v681 = vsel %vm679, %v670, 0
        %vm683 = vcmask 1043456
        %v685 = vsel %vm683, %v671, 0
        %687 = vmatprep.subr.bf16.mxu0 0
        %688 = vmatpush1.bf16.msra.mxu0 %v685
        %689 = vmatprep.subr.bf16.mxu0 0
        %690 = vmatpush1.bf16.msra.mxu0 0
        %691 = vmatprep.subr.bf16.mxu0 0
        %692 = vmatpush1.bf16.msra.mxu0 0
        %693 = vmatprep.subr.bf16.mxu0 0
        %694 = vmatpush1.bf16.msra.mxu0 0
        %695 = vmatprep.subr.bf16.mxu0 0
        %696 = vmatpush1.bf16.msra.mxu0 0
        %697 = vmatprep.subr.bf16.mxu0 0
        %698 = vmatpush1.bf16.msra.mxu0 0
        %699 = vmatprep.subr.bf16.mxu0 0
        %700 = vmatpush1.bf16.msra.mxu0 0
        %701 = vmatprep.subr.bf16.mxu0 0
        %702 = vmatpush1.bf16.msra.mxu0 0
        %703 = vmatprep.subr.bf16.mxu0 0
        %704 = vmatpush1.bf16.msra.mxu0 0
        %705 = vmatprep.subr.bf16.mxu0 0
        %706 = vmatpush1.bf16.msra.mxu0 0
        %707 = vmatprep.subr.bf16.mxu0 0
        %708 = vmatpush1.bf16.msra.mxu0 0
        %709 = vmatprep.subr.bf16.mxu0 0
        %710 = vmatpush1.bf16.msra.mxu0 0
        %711 = vmatprep.subr.bf16.mxu0 0
        %712 = vmatpush1.bf16.msra.mxu0 0
        %713 = vmatprep.subr.bf16.mxu0 0
        %714 = vmatpush1.bf16.msra.mxu0 0
        %715 = vmatprep.subr.bf16.mxu0 0
        %716 = vmatpush1.bf16.msra.mxu0 0
        %717 = vmatprep.subr.bf16.mxu0 0
        %718 = vmatpush1.bf16.msra.mxu0 0
        %719 = vmatprep.mubr.bf16.mxu0 0
        %720 = vmatmul.mubr.bf16.gmra.mrb[0].mxu0 %v681
        %v721 = vpop.f32.mrb[0].mxu0
        %v722 = vadd.f32 %v677, %v721
        %v723 = vpop.f32.mrb[0].mxu0
        %v724 = vpop.f32.mrb[0].mxu0
        %v725 = vadd.f32 %v677, %v724
        %v726 = vpop.f32.mrb[0].mxu0
        %727 = vdwg.mxu0
        %728 = vst [vmem:[%s456] sm:$0xff] %v722
        %729 = vst [vmem:[%s456 + $0x8] sm:$0xff] %v725
        %s730 = sand.u32 %s232, 1
        %s731 = scalar_lea.sflag [#allocation4], %s730
        %s732 = sand.u32 %s232, 1
        %s733 = smul.addr %s732, 16
        %s734 = scalar_lea.vmem [#allocation17], %s733
        // Predicated region
        $region93: #{tpu_custom_call.1} parent=55 // pred_check
          %p735 = pneg %p242
        $region94: #{tpu_custom_call.1} parent=55 // pred_check_branch
          %737 = sbr.rel (%p735) target = $region96
        $region95: #{tpu_custom_call.1} parent=55 // pred_region
          %s738 = smul.u32 2, %s30
          %s740 = ssub.s32 256, 256
          %741 = vsyncadd %s731, %s740
          %s742 = smul.addr %s738, 128
          %s743 = scalar_lea.hbm %s9, %s742
          %s744 = sshll.u32 %s734, 4
          %s745 = int_to_ptr.vmem [resolvable:$true] %s744
          %750 = dma.vmem_to_hbm [thread:$0]  %s745, 256, %s743, %s731, 128, 128, 8
        $region96: #{tpu_custom_call.1} parent=55 // pred_fallthru
          _
      $region56: #{tpu_custom_call.1} parent=5 // pred_fallthru
        _
      %p751 = scmp.le.s32.totalorder 2, %s25
      // Predicated region
      $region97: #{tpu_custom_call.1} parent=5 // pred_check
        %p752 = pneg %p751
      $region98: #{tpu_custom_call.1} parent=5 // pred_check_branch
        %754 = sbr.rel (%p752) target = $region100
      $region99: #{tpu_custom_call.1} parent=5 // pred_region
        %s755 = ssub.s32 %s25, 2
        // Predicated region
        $region101: #{tpu_custom_call.1} parent=99 // pred_check
          %p756 = pneg %p248
        $region102: #{tpu_custom_call.1} parent=99 // pred_check_branch
          %758 = sbr.rel (%p756) target = $region104
        $region103: #{tpu_custom_call.1} parent=99 // pred_region
          %s759 = sand.u32 %s233, 1
          %s760 = scalar_lea.sflag [#allocation4], %s759
          %s761 = sand.u32 %s233, 1
          %s762 = smul.addr %s761, 16
          %s763 = scalar_lea.vmem [#allocation17], %s762
          %764 = dma.done %s760, 256
        $region104: #{tpu_custom_call.1} parent=99 // pred_fallthru
          _
      $region100: #{tpu_custom_call.1} parent=5 // pred_fallthru
        _
    $region6: #{tpu_custom_call.1} parent=1 // loop_footer
      %s29 = sadd.s32 1, %s25
    $region7: #{tpu_custom_call.1} parent=1 // loop_footer_branch
      %24 = sbr.rel target = $region3
    $region8: #{tpu_custom_call.1} parent=1 // loop_exit
      _
    %765 = vsyncpa [#allocation3], 1
    %s766 = scalar_lea.sflag [#allocation3], 1
    %767 = vsyncpa %s766, 1
    %768 = vsyncpa [#allocation6], 1
    %769 = vsyncpa [#allocation9], 1
    %770 = vsyncpa [#allocation12], 1
    %771 = vsyncpa [#allocation15], 1
    %772 = vsyncpa [#allocation4], 1
    %s773 = scalar_lea.sflag [#allocation4], 1
    %774 = vsyncpa %s773, 1

</llo_original>
